<compile_context>
chip_gen: v6e
topology: v6e:2x2x1
jax: 0.10.0
libtpu: 0.0.40
codegen_flags: <defaults>
</compile_context>

<pallas_src>
import functools

import jax
import jax.numpy as jnp
from jax.experimental import pallas as pl
from jax.experimental.pallas import tpu as pltpu


# ----------------------------------------------------------------------------
# Layout / chip helpers
# ----------------------------------------------------------------------------
_LANE = 128


def _round_up(n, m):
    return ((n + m - 1) // m) * m


def _sublane(dtype):
    # Sub-32-bit dtypes pack along sublanes: f32 -> 8, bf16 -> 16, int8 -> 32.
    return 8 * max(1, 4 // jnp.dtype(dtype).itemsize)


def _padded_2d_bytes(rows, cols, dtype):
    """True VMEM footprint of a block's trailing (rows, cols) after Mosaic's
    (sublane, 128) tile padding."""
    return (_round_up(rows, _sublane(dtype))
            * _round_up(cols, _LANE)
            * jnp.dtype(dtype).itemsize)


def _largest_divisor_leq(n, cap):
    cap = max(1, min(n, int(cap)))
    for d in range(cap, 0, -1):
        if n % d == 0:
            return d
    return 1


def _chip_config():
    """Best-effort per-generation (vmem_limit_bytes, num_tensorcores, bf16_vpu)."""
    vmem_physical = 64 << 20          # conservative default (v7x-sized)
    try:
        vmem_physical = int(pltpu.get_tpu_info().vmem_capacity_bytes)
    except Exception:
        pass
    try:
        kind = jax.devices()[0].device_kind.lower()
    except Exception:
        kind = ""
    # v7x: 2 TensorCores per chip, only 64 MiB physical VMEM per core.
    num_tc = 2 if ("7" in kind or vmem_physical <= (64 << 20)) else 1
    if vmem_physical >= (100 << 20):
        vmem_limit = 80 << 20         # v5e / v6e: 128 MiB physical -> go big
    else:
        vmem_limit = 48 << 20         # v7x: stay well under 64 MiB physical
    has_bf16_vpu = "v5" not in kind   # v5e has no bf16 VALU
    return vmem_limit, num_tc, has_bf16_vpu


# ----------------------------------------------------------------------------
# Kernels
# ----------------------------------------------------------------------------
def se_fused_kernel(x_ref, w1t_ref, b1_ref, w2t_ref, b2_ref, o_ref,
                    *, scale_in_input_dtype):
    """Single-pass SE for one batch tile: block = (nb, C, HW)."""
    # Squeeze: global average pool over the spatial (lane) axis -> (nb, C).
    pooled = jnp.mean(x_ref[...].astype(jnp.float32), axis=-1)

    # Excitation (always f32): Linear + ReLU, Linear + Sigmoid.
    h = jnp.dot(pooled, w1t_ref[...], preferred_element_type=jnp.float32) + b1_ref[...]
    h = jnp.maximum(h, 0.0)
    s = jnp.dot(h, w2t_ref[...], preferred_element_type=jnp.float32) + b2_ref[...]
    s = jax.nn.sigmoid(s)                                    # (nb, C) f32

    # Scale: re-read x from VMEM; broadcast gates over the spatial axis.
    if scale_in_input_dtype:
        # bf16 VPU (v6e/v7x): halve vreg footprint of the streaming multiply.
        o_ref[...] = x_ref[...] * s.astype(o_ref.dtype)[:, :, None]
    else:
        o_ref[...] = (x_ref[...].astype(jnp.float32) * s[:, :, None]).astype(o_ref.dtype)


def se_gate_kernel(x_ref, w1t_ref, b1_ref, w2t_ref, b2_ref, s_ref, acc_ref,
                   *, hw_total, hw_tile, need_mask):
    """Reduction grid (i: batch 'parallel', k: HW tile 'arbitrary').

    Accumulates partial pooled sums into VMEM scratch; the tiny excitation
    matmuls + sigmoid run exactly once per batch tile (at the last HW tile).
    """
    k = pl.program_id(1)
    last = pl.num_programs(1) - 1

    @pl.when(k == 0)
    def _():
        acc_ref[...] = jnp.zeros_like(acc_ref)

    if need_mask:
        # Only the final HW tile can overrun HW: keep the iota/compare/select
        # off the VALU on every other tile.
        @pl.when(k != last)
        def _():
            acc_ref[...] += jnp.sum(x_ref[...].astype(jnp.float32), axis=-1)

        @pl.when(k == last)
        def _():
            x = x_ref[...].astype(jnp.float32)
            lane = jax.lax.broadcasted_iota(jnp.int32, x.shape, dimension=x.ndim - 1)
            x = jnp.where(k * hw_tile + lane < hw_total, x, 0.0)
            acc_ref[...] += jnp.sum(x, axis=-1)
    else:
        acc_ref[...] += jnp.sum(x_ref[...].astype(jnp.float32), axis=-1)

    @pl.when(k == last)
    def _():
        pooled = acc_ref[...] * (1.0 / hw_total)             # divide by true HW
        h = jnp.dot(pooled, w1t_ref[...], preferred_element_type=jnp.float32) + b1_ref[...]
        h = jnp.maximum(h, 0.0)
        s = jnp.dot(h, w2t_ref[...], preferred_element_type=jnp.float32) + b2_ref[...]
        s_ref[...] = jax.nn.sigmoid(s)[:, :, None]           # (1, C, 1)


def se_scale_kernel(x_ref, s_ref, o_ref, *, scale_in_input_dtype):
    """Elementwise scale pass: block (1, C, hw_tile) * gates (1, C, 1)."""
    if scale_in_input_dtype:
        o_ref[...] = x_ref[...] * s_ref[...].astype(o_ref.dtype)
    else:
        o_ref[...] = (x_ref[...].astype(jnp.float32) * s_ref[...]).astype(o_ref.dtype)


# ----------------------------------------------------------------------------
# Wrapper
# ----------------------------------------------------------------------------
def se_block(x, w1, b1, w2, b2, *, force_two_pass=False, two_pass_hw_tile=None):
    """x: (B, C, H, W). w1: (hid, C), b1: (hid,), w2: (C, hid), b2: (C,)
    (PyTorch nn.Linear weight convention: (out_features, in_features))."""
    B, C, H, W = x.shape
    HW = H * W
    hid = w1.shape[0]

    vmem_limit, num_tc, has_bf16_vpu = _chip_config()
    scale_in_input_dtype = bool(has_bf16_vpu and x.dtype == jnp.bfloat16)

    x_flat = x.reshape(B, C, HW)     # free: contiguous NCHW reshape
    w1t = w1.T                       # (C, hid)
    w2t = w2.T                       # (hid, C)
    b1r = b1.reshape(1, hid)
    b2r = b2.reshape(1, C)

    itemsize = jnp.dtype(x.dtype).itemsize

    # (8,128)-padded footprints == what Mosaic actually allocates in VMEM.
    padded_image = _padded_2d_bytes(C, HW, x.dtype)          # one (C, HW) slab
    weight_bytes = 2 * (_padded_2d_bytes(C, hid, jnp.float32)
                        + _padded_2d_bytes(1, hid, jnp.float32)
                        + _padded_2d_bytes(hid, C, jnp.float32)
                        + _padded_2d_bytes(1, C, jnp.float32))  # double-buffered
    usable = int(vmem_limit * 0.9) - weight_bytes            # 10% headroom

    flops = 4 * B * C * hid + 2 * B * C * HW                 # matmuls + pool + scale
    transcendentals = B * C                                   # sigmoid

    if (not force_two_pass) and usable > 0 and 4 * padded_image <= usable:
        # --- Preferred path: one fused pass, grid over batch tiles. ----------
        # Budget: 2x(in) + 2x(out) double-buffered blocks must fit `usable`.
        nb = _largest_divisor_leq(B, usable // (4 * padded_image))
        if num_tc > 1:
            # Keep >= 2*num_tc grid steps so both v7x TensorCores stream data.
            nb = min(nb, _largest_divisor_leq(B, max(1, B // min(B, 2 * num_tc))))
        cost = pl.CostEstimate(flops=flops, transcendentals=transcendentals,
                               bytes_accessed=2 * B * C * HW * itemsize)
        out_flat = pl.pallas_call(
            functools.partial(se_fused_kernel,
                              scale_in_input_dtype=scale_in_input_dtype),
            out_shape=jax.ShapeDtypeStruct((B, C, HW), x.dtype),
            grid=(B // nb,),
            in_specs=[
                pl.BlockSpec((nb, C, HW), lambda i: (i, 0, 0)),
                pl.BlockSpec((C, hid), lambda i: (0, 0)),
                pl.BlockSpec((1, hid), lambda i: (0, 0)),
                pl.BlockSpec((hid, C), lambda i: (0, 0)),
                pl.BlockSpec((1, C), lambda i: (0, 0)),
            ],
            out_specs=pl.BlockSpec((nb, C, HW), lambda i: (i, 0, 0)),
            compiler_params=pltpu.CompilerParams(
                dimension_semantics=("parallel",),
                vmem_limit_bytes=vmem_limit),
            cost_estimate=cost,
        )(x_flat, w1t, b1r, w2t, b2r)
        return out_flat.reshape(B, C, H, W)

    # --- Fallback path: per-image slab too big for VMEM -> two passes. -------
    Cpad = _round_up(C, _sublane(x.dtype))
    if two_pass_hw_tile is not None:
        hw_tile = int(two_pass_hw_tile)
    else:
        hw_cap = usable // (4 * Cpad * itemsize)              # 2x(in)+2x(out)
        hw_tile = max(_LANE, (hw_cap // _LANE) * _LANE)
    hw_tile = min(hw_tile, _round_up(HW, _LANE))
    num_hw = pl.cdiv(HW, hw_tile)
    need_mask = (HW % hw_tile) != 0

    # Pass 1: pooled sums (reduction over HW tiles) + excitation -> gates.
    gate_cost = pl.CostEstimate(
        flops=4 * B * C * hid + B * C * HW,
        transcendentals=B * C,
        bytes_accessed=B * C * HW * itemsize + B * C * 4)
    gates = pl.pallas_call(
        functools.partial(se_gate_kernel,
                          hw_total=HW, hw_tile=hw_tile, need_mask=need_mask),
        out_shape=jax.ShapeDtypeStruct((B, C, 1), jnp.float32),
        grid=(B, num_hw),
        in_specs=[
            pl.BlockSpec((1, C, hw_tile), lambda i, k: (i, 0, k)),
            pl.BlockSpec((C, hid), lambda i, k: (0, 0)),
            pl.BlockSpec((1, hid), lambda i, k: (0, 0)),
            pl.BlockSpec((hid, C), lambda i, k: (0, 0)),
            pl.BlockSpec((1, C), lambda i, k: (0, 0)),
        ],
        out_specs=pl.BlockSpec((1, C, 1), lambda i, k: (i, 0, 0)),
        scratch_shapes=[pltpu.VMEM((1, C), jnp.float32)],
        compiler_params=pltpu.CompilerParams(
            dimension_semantics=("parallel", "arbitrary"),
            vmem_limit_bytes=vmem_limit),
        cost_estimate=gate_cost,
    )(x_flat, w1t, b1r, w2t, b2r)

    # Pass 2: channel-wise rescale (pure streaming copy-modify-write).
    # (If DMA exposure shows up here on v5e/v6e, sweep pipeline_mode=Buffered(3)
    # on the x input spec; kept at the default depth for portability.)
    scale_cost = pl.CostEstimate(
        flops=B * C * HW, transcendentals=0,
        bytes_accessed=2 * B * C * HW * itemsize + B * C * 4)
    out_flat = pl.pallas_call(
        functools.partial(se_scale_kernel,
                          scale_in_input_dtype=scale_in_input_dtype),
        out_shape=jax.ShapeDtypeStruct((B, C, HW), x.dtype),
        grid=(B, num_hw),
        in_specs=[
            pl.BlockSpec((1, C, hw_tile), lambda i, k: (i, 0, k)),
            pl.BlockSpec((1, C, 1), lambda i, k: (i, 0, 0)),
        ],
        out_specs=pl.BlockSpec((1, C, hw_tile), lambda i, k: (i, 0, k)),
        compiler_params=pltpu.CompilerParams(
            dimension_semantics=("parallel", "parallel"),
            vmem_limit_bytes=vmem_limit),
        cost_estimate=scale_cost,
    )(x_flat, gates)
    return out_flat.reshape(B, C, H, W)


# ----------------------------------------------------------------------------
# Demo / correctness check
# ----------------------------------------------------------------------------
if __name__ == "__main__":
    def make_params(key, C, reduction):
        hid = max(1, C // reduction)
        k1, k2, k3, k4 = jax.random.split(key, 4)
        w1 = jax.random.normal(k1, (hid, C), jnp.float32) * 0.1
        b1 = jax.random.normal(k2, (hid,), jnp.float32) * 0.1
        w2 = jax.random.normal(k3, (C, hid), jnp.float32) * 0.1
        b2 = jax.random.normal(k4, (C,), jnp.float32) * 0.1
        return w1, b1, w2, b2

    def reference(x, w1, b1, w2, b2):
        pooled = x.mean(axis=(2, 3))
        h = jnp.maximum(pooled @ w1.T + b1, 0.0)
        s = jax.nn.sigmoid(h @ w2.T + b2)
        return x * s[:, :, None, None]

    # Test 1: small shape -> fused single-pass path (grid over batch tiles).
    key = jax.random.PRNGKey(0)
    kx, kp = jax.random.split(key)
    B, C, H, W = 2, 32, 16, 16
    x = jax.random.normal(kx, (B, C, H, W), jnp.float32)
    w1, b1, w2, b2 = make_params(kp, C, reduction=16)
    out = se_block(x, w1, b1, w2, b2)
    jax.block_until_ready(out)
    ref = reference(x, w1, b1, w2, b2)
    assert out.shape == x.shape
    assert jnp.allclose(out, ref, atol=1e-5, rtol=1e-5), "fused path mismatch"

    # Test 2: force the two-pass (HW-tiled reduction + scale) path; HW = 2304
    # with hw_tile = 1024 -> 3 tiles, exercising the last-tile-only masking.
    kx2, kp2 = jax.random.split(jax.random.PRNGKey(1))
    B2, C2, H2, W2 = 2, 32, 48, 48
    x2 = jax.random.normal(kx2, (B2, C2, H2, W2), jnp.float32)
    w1b, b1b, w2b, b2b = make_params(kp2, C2, reduction=16)
    out2 = se_block(x2, w1b, b1b, w2b, b2b,
                    force_two_pass=True, two_pass_hw_tile=1024)
    jax.block_until_ready(out2)
    ref2 = reference(x2, w1b, b1b, w2b, b2b)
    assert jnp.allclose(out2, ref2, atol=1e-5, rtol=1e-5), "tiled path mismatch"

    print("KERNEL_OK")
</pallas_src>

<mosaic_0001>
module attributes {stable_mosaic.version = 11 : i64} {
  func.func @se_fused_kernel(%arg0: i32, %arg1: memref<1x32x256xf32, #tpu.memory_space<vmem>>, %arg2: memref<32x2xf32, #tpu.memory_space<vmem>>, %arg3: memref<1x2xf32, #tpu.memory_space<vmem>>, %arg4: memref<2x32xf32, #tpu.memory_space<vmem>>, %arg5: memref<1x32xf32, #tpu.memory_space<vmem>>, %arg6: memref<1x32x256xf32, #tpu.memory_space<vmem>>) attributes {dimension_semantics = [#tpu.dimension_semantics<parallel>], iteration_bounds = array<i64: 2>, scalar_prefetch = 0 : i64, scratch_operands = 0 : i64, tpu.core_type = #tpu.core_type<tc>, window_params = [{transform_indices = @transform_0, window_bounds = array<i64: 1, 32, 256>}, {pipeline_mode = #tpu.pipeline_mode<synchronous>, transform_indices = @transform_1, window_bounds = array<i64: 32, 2>}, {pipeline_mode = #tpu.pipeline_mode<synchronous>, transform_indices = @transform_2, window_bounds = array<i64: 1, 2>}, {pipeline_mode = #tpu.pipeline_mode<synchronous>, transform_indices = @transform_3, window_bounds = array<i64: 2, 32>}, {pipeline_mode = #tpu.pipeline_mode<synchronous>, transform_indices = @transform_4, window_bounds = array<i64: 1, 32>}, {transform_indices = @transform_5, window_bounds = array<i64: 1, 32, 256>}]} {
    %c0 = arith.constant 0 : index
    %c0_0 = arith.constant 0 : index
    %c0_1 = arith.constant 0 : index
    %0 = vector.load %arg1[%c0, %c0_0, %c0_1] : memref<1x32x256xf32, #tpu.memory_space<vmem>>, vector<1x32x256xf32>
    %cst = arith.constant dense<0.000000e+00> : vector<1x32xf32>
    %1 = vector.multi_reduction <add>, %0, %cst [2] : vector<1x32x256xf32> to vector<1x32xf32>
    %cst_2 = arith.constant 2.560000e+02 : f32
    %2 = vector.broadcast %cst_2 : f32 to vector<1x32xf32>
    %3 = arith.divf %1, %2 : vector<1x32xf32>
    %c0_3 = arith.constant 0 : index
    %c0_4 = arith.constant 0 : index
    %4 = vector.load %arg2[%c0_3, %c0_4] : memref<32x2xf32, #tpu.memory_space<vmem>>, vector<32x2xf32>
    %cst_5 = arith.constant dense<0.000000e+00> : vector<1x2xf32>
    %5 = tpu.matmul %3, %4, %cst_5 {dimension_numbers = #tpu.dot_dimension_numbers<[1], [0], [0], [1], [0, 0, 1, 1], [], []>} : vector<1x32xf32>, vector<32x2xf32>, vector<1x2xf32> -> vector<1x2xf32>
    %c0_6 = arith.constant 0 : index
    %c0_7 = arith.constant 0 : index
    %6 = vector.load %arg3[%c0_6, %c0_7] : memref<1x2xf32, #tpu.memory_space<vmem>>, vector<1x2xf32>
    %7 = arith.addf %5, %6 : vector<1x2xf32>
    %cst_8 = arith.constant 0.000000e+00 : f32
    %8 = vector.broadcast %cst_8 : f32 to vector<1x2xf32>
    %9 = arith.maximumf %7, %8 : vector<1x2xf32>
    %c0_9 = arith.constant 0 : index
    %c0_10 = arith.constant 0 : index
    %10 = vector.load %arg4[%c0_9, %c0_10] : memref<2x32xf32, #tpu.memory_space<vmem>>, vector<2x32xf32>
    %cst_11 = arith.constant dense<0.000000e+00> : vector<1x32xf32>
    %11 = tpu.matmul %9, %10, %cst_11 {dimension_numbers = #tpu.dot_dimension_numbers<[1], [0], [0], [1], [0, 0, 1, 1], [], []>} : vector<1x2xf32>, vector<2x32xf32>, vector<1x32xf32> -> vector<1x32xf32>
    %c0_12 = arith.constant 0 : index
    %c0_13 = arith.constant 0 : index
    %12 = vector.load %arg5[%c0_12, %c0_13] : memref<1x32xf32, #tpu.memory_space<vmem>>, vector<1x32xf32>
    %13 = arith.addf %11, %12 : vector<1x32xf32>
    %14 = arith.negf %13 : vector<1x32xf32>
    %15 = math.exp %14 : vector<1x32xf32>
    %cst_14 = arith.constant 1.000000e+00 : f32
    %16 = vector.broadcast %cst_14 : f32 to vector<1x32xf32>
    %17 = arith.addf %16, %15 : vector<1x32xf32>
    %18 = arith.divf %16, %17 : vector<1x32xf32>
    %c0_15 = arith.constant 0 : index
    %c0_16 = arith.constant 0 : index
    %c0_17 = arith.constant 0 : index
    %19 = vector.load %arg1[%c0_15, %c0_16, %c0_17] : memref<1x32x256xf32, #tpu.memory_space<vmem>>, vector<1x32x256xf32>
    %20 = vector.shape_cast %18 : vector<1x32xf32> to vector<1x32x1xf32>
    %21 = vector.broadcast %20 : vector<1x32x1xf32> to vector<1x32x256xf32>
    %22 = arith.mulf %19, %21 : vector<1x32x256xf32>
    %c0_18 = arith.constant 0 : index
    %c0_19 = arith.constant 0 : index
    %c0_20 = arith.constant 0 : index
    %23 = vector.load %arg6[%c0_18, %c0_19, %c0_20] : memref<1x32x256xf32, #tpu.memory_space<vmem>>, vector<1x32x256xf32>
    tpu.vector_store %arg6[%c0_18, %c0_19, %c0_20], %22 {strides = array<i32>} : memref<1x32x256xf32, #tpu.memory_space<vmem>>, vector<1x32x256xf32>,
    return
  }
  func.func @transform_0(%arg0: i32) -> (i32, i32, i32) {
    %c0_i32 = arith.constant 0 : i32
    %c0_i32_0 = arith.constant 0 : i32
    %c0_i32_1 = arith.constant 0 : i32
    return %arg0, %c0_i32, %c0_i32_0 : i32, i32, i32
  }
  func.func @transform_1(%arg0: i32) -> (i32, i32) {
    %c0_i32 = arith.constant 0 : i32
    %c0_i32_0 = arith.constant 0 : i32
    %c0_i32_1 = arith.constant 0 : i32
    return %c0_i32, %c0_i32_0 : i32, i32
  }
  func.func @transform_2(%arg0: i32) -> (i32, i32) {
    %c0_i32 = arith.constant 0 : i32
    %c0_i32_0 = arith.constant 0 : i32
    %c0_i32_1 = arith.constant 0 : i32
    return %c0_i32, %c0_i32_0 : i32, i32
  }
  func.func @transform_3(%arg0: i32) -> (i32, i32) {
    %c0_i32 = arith.constant 0 : i32
    %c0_i32_0 = arith.constant 0 : i32
    %c0_i32_1 = arith.constant 0 : i32
    return %c0_i32, %c0_i32_0 : i32, i32
  }
  func.func @transform_4(%arg0: i32) -> (i32, i32) {
    %c0_i32 = arith.constant 0 : i32
    %c0_i32_0 = arith.constant 0 : i32
    %c0_i32_1 = arith.constant 0 : i32
    return %c0_i32, %c0_i32_0 : i32, i32
  }
  func.func @transform_5(%arg0: i32) -> (i32, i32, i32) {
    %c0_i32 = arith.constant 0 : i32
    %c0_i32_0 = arith.constant 0 : i32
    %c0_i32_1 = arith.constant 0 : i32
    return %arg0, %c0_i32, %c0_i32_0 : i32, i32, i32
  }
}

</mosaic_0001>

<llo_original>
// kernel: tpu_custom_call.1
$region0: #{tpu_custom_call.1}
  #allocation0 [shape = 'u32[]', space=smem, size = 0x4, offset = 0x4, fixed_abs, tag = 'smem constant byte address 0x4 - core index']
  #allocation1 [shape = 'u32[144,128]{1,0:T(1,128)}', space=vmem, size = 0x12000, scoped, tag = 'internal scratch']
  %s0 = inlined_call_operand.hbm [shape: f32[2,32,256], index: 0, kind: input, shape index: {}]
  %s1 = inlined_call_operand.vmem [shape: f32[32,2], index: 1, kind: input, shape index: {}]
  %s2 = inlined_call_operand.vmem [shape: f32[1,2], index: 2, kind: input, shape index: {}]
  %s3 = inlined_call_operand.vmem [shape: f32[2,32], index: 3, kind: input, shape index: {}]
  %s4 = inlined_call_operand.vmem [shape: f32[1,32], index: 4, kind: input, shape index: {}]
  %s5 = inlined_call_operand.hbm [shape: f32[2,32,256], index: 5, kind: output, shape index: {}]
  %s6 = sld [smem:[#allocation0]]
  $region57: #{tpu_custom_call.1} parent=0
    _
  %s8 = ssub.s32 1, %s6
  %s9 = scalar_select 0, %s8, %s6
  $region1: #{tpu_custom_call.1} parent=0
    #allocation2 [shape = 'u8[65536]{0}', space=vmem, size = 0x10000, scoped, tag = 'input window, operand 0']
    #allocation3 [shape = 's32[2]{0}', space=sflag, size = 0x8, scoped, tag = 'scoped memory for tpu_custom_call.1']
    #allocation4 [shape = 's32[2]{0}', space=sflag, size = 0x8, scoped, tag = 'scoped memory for tpu_custom_call.1']
    #allocation5 [shape = 'u8[65536]{0}', space=vmem, size = 0x10000, scoped, tag = 'output window, operand 0']
    %10 = vsyncpa [#allocation3], 0
    %s11 = scalar_lea.sflag [#allocation3], 1
    %12 = vsyncpa %s11, 0
    %13 = vsyncpa [#allocation4], 0
    %s14 = scalar_lea.sflag [#allocation4], 1
    %15 = vsyncpa %s14, 0
    loop: start=0, step=1, limit=4
    $region2: #{tpu_custom_call.1} parent=1 // loop_pre_header
      _
    $region3: #{tpu_custom_call.1} parent=1 // loop_header
      %s17 = sphi 0, %s21
      %p18 = scmp.ge.s32.totalorder %s17, 4
      %s27 = sphi 0, %s29
      %s30 = sphi 0, %s27
      %s31 = sphi 0, %s30
      %s47 = sphi 0, %s31
      %s51 = sphi 0, %s51
      %s53 = sphi 0, %s51
      %s54 = sphi 0, %s53
      %s68 = sphi 0, %s54
      %s72 = sphi 0, %s72
      %s74 = sphi 0, %s72
      %s75 = sphi 0, %s74
      %s89 = sphi 0, %s75
      %s93 = sphi 0, %s93
      %s95 = sphi 0, %s93
      %s96 = sphi 0, %s95
      %s110 = sphi 0, %s96
      %s114 = sphi 0, %s114
      %s116 = sphi 0, %s114
      %s117 = sphi 0, %s116
      %s131 = sphi 0, %s117
      %s137 = sphi 0, %s139
      %s140 = sphi 0, %s137
      %s141 = sphi 0, %s140
      %s157 = sphi 0, %s141
    $region4: #{tpu_custom_call.1} parent=1 // loop_header_branch
      %20 = sbr.rel (%p18) target = $region8
    $region5: #{tpu_custom_call.1} parent=1 // loop_body
      %s22 = ssub.s32 %s17, 1
      %s23 = ssub.s32 %s17, 2
      %s24 = sadd.s32 %s17, 1
      %s25 = ssub.s32 %s17, %s24
      %p26 = scmp.eq.s32.totalorder %s25, 0
      %s28 = sadd.s32 %s27, 1
      %s29 = scalar_select %p26, %s27, %s28
      %p32 = pneg %p26
      %p33 = scmp.eq.s32.totalorder %s17, 1
      %p34 = por %p32, %p33
      %p35 = scmp.ne.s32.totalorder %s27, %s30
      %p36 = scmp.eq.s32.totalorder %s17, 0
      %p37 = por %p35, %p36
      %p38 = scmp.ne.s32.totalorder %s27, %s30
      %p39 = scmp.eq.s32.totalorder %s22, 1
      %p40 = por %p38, %p39
      %p41 = scmp.ne.s32.totalorder %s30, %s31
      %p42 = scmp.eq.s32.totalorder %s22, 0
      %p43 = por %p41, %p42
      %p44 = scmp.ne.s32.totalorder %s30, %s31
      %p45 = scmp.eq.s32.totalorder %s23, 1
      %p46 = por %p44, %p45
      %p48 = scmp.ne.s32.totalorder %s31, %s47
      %p49 = scmp.eq.s32.totalorder %s23, 0
      %p50 = por %p48, %p49
      %s52 = sadd.s32 %s51, 1
      %p55 = scmp.eq.s32.totalorder %s17, 1
      %p56 = scmp.ne.s32.totalorder %s51, %s53
      %p57 = scmp.eq.s32.totalorder %s17, 0
      %p58 = por %p56, %p57
      %p59 = scmp.ne.s32.totalorder %s51, %s53
      %p60 = scmp.eq.s32.totalorder %s22, 1
      %p61 = por %p59, %p60
      %p62 = scmp.ne.s32.totalorder %s53, %s54
      %p63 = scmp.eq.s32.totalorder %s22, 0
      %p64 = por %p62, %p63
      %p65 = scmp.ne.s32.totalorder %s53, %s54
      %p66 = scmp.eq.s32.totalorder %s23, 1
      %p67 = por %p65, %p66
      %p69 = scmp.ne.s32.totalorder %s54, %s68
      %p70 = scmp.eq.s32.totalorder %s23, 0
      %p71 = por %p69, %p70
      %s73 = sadd.s32 %s72, 1
      %p76 = scmp.eq.s32.totalorder %s17, 1
      %p77 = scmp.ne.s32.totalorder %s72, %s74
      %p78 = scmp.eq.s32.totalorder %s17, 0
      %p79 = por %p77, %p78
      %p80 = scmp.ne.s32.totalorder %s72, %s74
      %p81 = scmp.eq.s32.totalorder %s22, 1
      %p82 = por %p80, %p81
      %p83 = scmp.ne.s32.totalorder %s74, %s75
      %p84 = scmp.eq.s32.totalorder %s22, 0
      %p85 = por %p83, %p84
      %p86 = scmp.ne.s32.totalorder %s74, %s75
      %p87 = scmp.eq.s32.totalorder %s23, 1
      %p88 = por %p86, %p87
      %p90 = scmp.ne.s32.totalorder %s75, %s89
      %p91 = scmp.eq.s32.totalorder %s23, 0
      %p92 = por %p90, %p91
      %s94 = sadd.s32 %s93, 1
      %p97 = scmp.eq.s32.totalorder %s17, 1
      %p98 = scmp.ne.s32.totalorder %s93, %s95
      %p99 = scmp.eq.s32.totalorder %s17, 0
      %p100 = por %p98, %p99
      %p101 = scmp.ne.s32.totalorder %s93, %s95
      %p102 = scmp.eq.s32.totalorder %s22, 1
      %p103 = por %p101, %p102
      %p104 = scmp.ne.s32.totalorder %s95, %s96
      %p105 = scmp.eq.s32.totalorder %s22, 0
      %p106 = por %p104, %p105
      %p107 = scmp.ne.s32.totalorder %s95, %s96
      %p108 = scmp.eq.s32.totalorder %s23, 1
      %p109 = por %p107, %p108
      %p111 = scmp.ne.s32.totalorder %s96, %s110
      %p112 = scmp.eq.s32.totalorder %s23, 0
      %p113 = por %p111, %p112
      %s115 = sadd.s32 %s114, 1
      %p118 = scmp.eq.s32.totalorder %s17, 1
      %p119 = scmp.ne.s32.totalorder %s114, %s116
      %p120 = scmp.eq.s32.totalorder %s17, 0
      %p121 = por %p119, %p120
      %p122 = scmp.ne.s32.totalorder %s114, %s116
      %p123 = scmp.eq.s32.totalorder %s22, 1
      %p124 = por %p122, %p123
      %p125 = scmp.ne.s32.totalorder %s116, %s117
      %p126 = scmp.eq.s32.totalorder %s22, 0
      %p127 = por %p125, %p126
      %p128 = scmp.ne.s32.totalorder %s116, %s117
      %p129 = scmp.eq.s32.totalorder %s23, 1
      %p130 = por %p128, %p129
      %p132 = scmp.ne.s32.totalorder %s117, %s131
      %p133 = scmp.eq.s32.totalorder %s23, 0
      %p134 = por %p132, %p133
      %s135 = ssub.s32 %s17, %s24
      %p136 = scmp.eq.s32.totalorder %s135, 0
      %s138 = sadd.s32 %s137, 1
      %s139 = scalar_select %p136, %s137, %s138
      %p142 = pneg %p136
      %p143 = scmp.eq.s32.totalorder %s17, 1
      %p144 = por %p142, %p143
      %p145 = scmp.ne.s32.totalorder %s137, %s140
      %p146 = scmp.eq.s32.totalorder %s17, 0
      %p147 = por %p145, %p146
      %p148 = scmp.ne.s32.totalorder %s137, %s140
      %p149 = scmp.eq.s32.totalorder %s22, 1
      %p150 = por %p148, %p149
      %p151 = scmp.ne.s32.totalorder %s140, %s141
      %p152 = scmp.eq.s32.totalorder %s22, 0
      %p153 = por %p151, %p152
      %p154 = scmp.ne.s32.totalorder %s140, %s141
      %p155 = scmp.eq.s32.totalorder %s23, 1
      %p156 = por %p154, %p155
      %p158 = scmp.ne.s32.totalorder %s141, %s157
      %p159 = scmp.eq.s32.totalorder %s23, 0
      %p160 = por %p158, %p159
      %p161 = scmp.le.s32.totalorder 1, %s17
      %p162 = scmp.lt.s32.totalorder %s17, 3
      %p163 = pnand %p161, %p162
      %p164 = pneg %p163
      // Predicated region
      $region9: #{tpu_custom_call.1} parent=5 // pred_check
        _
      $region10: #{tpu_custom_call.1} parent=5 // pred_check_branch
        %166 = sbr.rel (%p163) target = $region12
      $region11: #{tpu_custom_call.1} parent=5 // pred_region
        %s167 = ssub.s32 %s17, 1
        // Predicated region
        $region13: #{tpu_custom_call.1} parent=11 // pred_check
          %p168 = pneg %p64
        $region14: #{tpu_custom_call.1} parent=11 // pred_check_branch
          %170 = sbr.rel (%p168) target = $region16
        $region15: #{tpu_custom_call.1} parent=11 // pred_region
          _
        $region16: #{tpu_custom_call.1} parent=11 // pred_fallthru
          _
        // Predicated region
        $region17: #{tpu_custom_call.1} parent=11 // pred_check
          %p171 = pneg %p85
        $region18: #{tpu_custom_call.1} parent=11 // pred_check_branch
          %173 = sbr.rel (%p171) target = $region20
        $region19: #{tpu_custom_call.1} parent=11 // pred_region
          _
        $region20: #{tpu_custom_call.1} parent=11 // pred_fallthru
          _
        // Predicated region
        $region21: #{tpu_custom_call.1} parent=11 // pred_check
          %p174 = pneg %p106
        $region22: #{tpu_custom_call.1} parent=11 // pred_check_branch
          %176 = sbr.rel (%p174) target = $region24
        $region23: #{tpu_custom_call.1} parent=11 // pred_region
          _
        $region24: #{tpu_custom_call.1} parent=11 // pred_fallthru
          _
        // Predicated region
        $region25: #{tpu_custom_call.1} parent=11 // pred_check
          %p177 = pneg %p127
        $region26: #{tpu_custom_call.1} parent=11 // pred_check_branch
          %179 = sbr.rel (%p177) target = $region28
        $region27: #{tpu_custom_call.1} parent=11 // pred_region
          _
        $region28: #{tpu_custom_call.1} parent=11 // pred_fallthru
          _
      $region12: #{tpu_custom_call.1} parent=5 // pred_fallthru
        _
      %p180 = scmp.lt.s32.totalorder %s17, 2
      // Predicated region
      $region29: #{tpu_custom_call.1} parent=5 // pred_check
        %p181 = pneg %p180
      $region30: #{tpu_custom_call.1} parent=5 // pred_check_branch
        %183 = sbr.rel (%p181) target = $region32
      $region31: #{tpu_custom_call.1} parent=5 // pred_region
        // Predicated region
        $region33: #{tpu_custom_call.1} parent=31 // pred_check
          %p184 = pneg %p37
        $region34: #{tpu_custom_call.1} parent=31 // pred_check_branch
          %186 = sbr.rel (%p184) target = $region36
        $region35: #{tpu_custom_call.1} parent=31 // pred_region
          %s187 = sand.u32 %s27, 1
          %s188 = scalar_lea.sflag [#allocation3], %s187
          %s189 = sand.u32 %s27, 1
          %s190 = smul.addr %s189, 64
          %s191 = scalar_lea.vmem [#allocation2], %s190
          %s193 = ssub.s32 1024, 1024
          %194 = vsyncadd %s188, %s193
          %s195 = smul.addr %s17, 8
          %s196 = smul.addr %s195, 128
          %s197 = scalar_lea.hbm %s0, %s196
          %s198 = sshll.u32 %s191, 4
          %s199 = int_to_ptr.vmem [resolvable:$true] %s198
          %204 = dma.hbm_to_vmem [thread:$0]  %s197, 1024, %s199, %s188, 256, 256, 16
        $region36: #{tpu_custom_call.1} parent=31 // pred_fallthru
          _
      $region32: #{tpu_custom_call.1} parent=5 // pred_fallthru
        _
      %p205 = scmp.le.s32.totalorder 1, %s17
      %p206 = scmp.lt.s32.totalorder %s17, 3
      %p207 = pnand %p205, %p206
      %p208 = pneg %p207
      // Predicated region
      $region37: #{tpu_custom_call.1} parent=5 // pred_check
        _
      $region38: #{tpu_custom_call.1} parent=5 // pred_check_branch
        %210 = sbr.rel (%p207) target = $region40
      $region39: #{tpu_custom_call.1} parent=5 // pred_region
        %s211 = ssub.s32 %s17, 1
        %s212 = sand.u32 %s30, 1
        %s213 = scalar_lea.sflag [#allocation3], %s212
        %s214 = sand.u32 %s30, 1
        %s215 = smul.addr %s214, 64
        %s216 = scalar_lea.vmem [#allocation2], %s215
        // Predicated region
        $region41: #{tpu_custom_call.1} parent=39 // pred_check
          %p217 = pneg %p43
        $region42: #{tpu_custom_call.1} parent=39 // pred_check_branch
          %219 = sbr.rel (%p217) target = $region44
        $region43: #{tpu_custom_call.1} parent=39 // pred_region
          %220 = dma.done %s213, 1024
        $region44: #{tpu_custom_call.1} parent=39 // pred_fallthru
          _
        %s221 = sand.u32 %s30, 1
        %s222 = scalar_lea.sflag [#allocation3], %s221
        %s223 = sand.u32 %s30, 1
        %s224 = smul.addr %s223, 64
        %s225 = scalar_lea.vmem [#allocation2], %s224
        %p226 = pneg %p43
        %p227 = pneg %p40
        %p228 = pneg %p64
        %p229 = pneg %p61
        %p230 = pneg %p85
        %p231 = pneg %p82
        %p232 = pneg %p106
        %p233 = pneg %p103
        %p234 = pneg %p127
        %p235 = pneg %p124
        %p236 = pneg %p153
        %p237 = pneg %p150
        %s238 = sand.u32 %s140, 1
        %s239 = scalar_lea.sflag [#allocation4], %s238
        %s240 = sand.u32 %s140, 1
        %s241 = smul.addr %s240, 64
        %s242 = scalar_lea.vmem [#allocation5], %s241
        %v243 = vld [vmem:[%s216] sm:$0xff]
        %v244 = vld [vmem:[%s216 + $0x8] sm:$0xff]
        %v245 = vld [vmem:[%s216 + $0x10] sm:$0xff]
        %v246 = vld [vmem:[%s216 + $0x18] sm:$0xff]
        %v247 = vld [vmem:[%s216 + $0x20] sm:$0xff]
        %v248 = vld [vmem:[%s216 + $0x28] sm:$0xff]
        %v249 = vld [vmem:[%s216 + $0x30] sm:$0xff]
        %v250 = vld [vmem:[%s216 + $0x38] sm:$0xff]
        %v251 = vadd.f32 %v243, %v244
        %252 = vadd.xlane.f32.xlu0 %v251
        %v253 = vpop.xlane.xlu0 %252
        %v254 = vadd.f32 %v245, %v246
        %255 = vadd.xlane.f32.xlu0 %v254
        %v256 = vpop.xlane.xlu0 %255
        %v257 = vadd.f32 %v247, %v248
        %258 = vadd.xlane.f32.xlu0 %v257
        %v259 = vpop.xlane.xlu0 %258
        %v260 = vadd.f32 %v249, %v250
        %261 = vadd.xlane.f32.xlu0 %v260
        %v262 = vpop.xlane.xlu0 %261
        %v263 = vrcp.pop 256.0
        %v264 = vmul.f32 %v253, %v263
        %v265 = vmul.f32 %v256, %v263
        %v266 = vmul.f32 %v259, %v263
        %v267 = vmul.f32 %v262, %v263
        %v268 = vld [vmem:[%s1] sm:$0xff]
        %v269 = vld [vmem:[%s1 + $0x8] sm:$0xff]
        %v270 = vld [vmem:[%s1 + $0x10] sm:$0xff]
        %v271 = vld [vmem:[%s1 + $0x18] sm:$0xff]
        %v272 = vld [vmem:[%s2] sm:$0x1]
        %v277 = vlaneseq
        %v278 = vand.u32 %v277, 127
        %v279 = vlaneseq
        %v280 = vshrl.u32 %v279, 7
        %v281 = vsub.s32 %v278, %v280
        %v282 = vrot.slane %v264, %v281
        %v283 = vadd.s32 %v278, 4294967288
        %v284 = vlaneseq
        %v285 = vshrl.u32 %v284, 7
        %v286 = vsub.s32 %v283, %v285
        %v287 = vrot.slane %v265, %v286
        %vm288 = vcmask 130112
        %v289 = vsel %vm288, %v287, %v282
        %v290 = vadd.s32 %v278, 4294967280
        %v291 = vlaneseq
        %v292 = vshrl.u32 %v291, 7
        %v293 = vsub.s32 %v290, %v292
        %v294 = vrot.slane %v266, %v293
        %vm295 = vcmask 195712
        %v296 = vsel %vm295, %v294, %v289
        %v297 = vadd.s32 %v278, 4294967272
        %v298 = vlaneseq
        %v299 = vshrl.u32 %v298, 7
        %v300 = vsub.s32 %v297, %v299
        %v301 = vrot.slane %v267, %v300
        %vm302 = vcmask 261312
        %v303 = vsel %vm302, %v301, %v296
        %vm304 = vcmask 261120
        %v305 = vsel %vm304, %v303, 0
        %307 = vmatprep.subr.mxu0 0.0
        %308 = vmatpush1.msra.mxu0 0.0
        %309 = vmatprep.subr.mxu0 0.0
        %310 = vmatpush1.msra.mxu0 0.0
        %311 = vmatprep.subr.mxu0 0.0
        %312 = vmatpush1.msra.mxu0 0.0
        %313 = vmatprep.subr.mxu0 0.0
        %314 = vmatpush1.msra.mxu0 0.0
        %315 = vmatprep.subr.mxu0 0.0
        %316 = vmatpush1.msra.mxu0 0.0
        %317 = vmatprep.subr.mxu0 0.0
        %318 = vmatpush1.msra.mxu0 0.0
        %319 = vmatprep.subr.mxu0 0.0
        %320 = vmatpush1.msra.mxu0 0.0
        %321 = vmatprep.subr.mxu0 0.0
        %322 = vmatpush1.msra.mxu0 0.0
        %323 = vmatprep.subr.mxu0 0.0
        %324 = vmatpush1.msra.mxu0 0.0
        %325 = vmatprep.subr.mxu0 0.0
        %326 = vmatpush1.msra.mxu0 0.0
        %327 = vmatprep.subr.mxu0 0.0
        %328 = vmatpush1.msra.mxu0 0.0
        %329 = vmatprep.subr.mxu0 0.0
        %330 = vmatpush1.msra.mxu0 0.0
        %331 = vmatprep.subr.mxu0 0.0
        %332 = vmatpush1.msra.mxu0 %v271
        %333 = vmatprep.subr.mxu0 0.0
        %334 = vmatpush1.msra.mxu0 %v270
        %335 = vmatprep.subr.mxu0 0.0
        %336 = vmatpush1.msra.mxu0 %v269
        %337 = vmatprep.subr.mxu0 0.0
        %338 = vmatpush1.msra.mxu0 %v268
        %339 = vmatprep.subr.mxu0 0.0
        %340 = vmatpush2.msra.mxu0 0.0
        %341 = vmatprep.subr.mxu0 0.0
        %342 = vmatpush2.msra.mxu0 0.0
        %343 = vmatprep.subr.mxu0 0.0
        %344 = vmatpush2.msra.mxu0 0.0
        %345 = vmatprep.subr.mxu0 0.0
        %346 = vmatpush2.msra.mxu0 0.0
        %347 = vmatprep.subr.mxu0 0.0
        %348 = vmatpush2.msra.mxu0 0.0
        %349 = vmatprep.subr.mxu0 0.0
        %350 = vmatpush2.msra.mxu0 0.0
        %351 = vmatprep.subr.mxu0 0.0
        %352 = vmatpush2.msra.mxu0 0.0
        %353 = vmatprep.subr.mxu0 0.0
        %354 = vmatpush2.msra.mxu0 0.0
        %355 = vmatprep.subr.mxu0 0.0
        %356 = vmatpush2.msra.mxu0 0.0
        %357 = vmatprep.subr.mxu0 0.0
        %358 = vmatpush2.msra.mxu0 0.0
        %359 = vmatprep.subr.mxu0 0.0
        %360 = vmatpush2.msra.mxu0 0.0
        %361 = vmatprep.subr.mxu0 0.0
        %362 = vmatpush2.msra.mxu0 0.0
        %363 = vmatprep.subr.mxu0 0.0
        %364 = vmatpush2.msra.mxu0 0.0
        %365 = vmatprep.subr.mxu0 0.0
        %366 = vmatpush2.msra.mxu0 0.0
        %367 = vmatprep.subr.mxu0 0.0
        %368 = vmatpush2.msra.mxu0 0.0
        %369 = vmatprep.subr.mxu0 0.0
        %370 = vmatpush2.msra.mxu0 0.0
        %371 = vmatprep.mubr.f32.mxu0 0.0
        %372 = vmatmul.mubr.f32.gmra.mxu0 %v305
        %v373 = vpop.f32.mrf.mxu0
        %v374 = vadd.f32 %v272, %v373
        %v375 = vpop.f32.mrf.mxu0
        %376 = vdwg.mxu0
        %v377 = vmax.f32 %v374, 0.0
        %v378 = vld [vmem:[%s3] sm:$0x3]
        %v379 = vld [vmem:[%s4] sm:$0x1]
        %vm380 = vcmask 15360
        %v382 = vsel %vm380, %v377, 0
        %vm384 = vcmask 1041408
        %v386 = vsel %vm384, %v378, 0
        %388 = vmatprep.subr.mxu0 0.0
        %389 = vmatpush1.msra.mxu0 0.0
        %390 = vmatprep.subr.mxu0 0.0
        %391 = vmatpush1.msra.mxu0 0.0
        %392 = vmatprep.subr.mxu0 0.0
        %393 = vmatpush1.msra.mxu0 0.0
        %394 = vmatprep.subr.mxu0 0.0
        %395 = vmatpush1.msra.mxu0 0.0
        %396 = vmatprep.subr.mxu0 0.0
        %397 = vmatpush1.msra.mxu0 0.0
        %398 = vmatprep.subr.mxu0 0.0
        %399 = vmatpush1.msra.mxu0 0.0
        %400 = vmatprep.subr.mxu0 0.0
        %401 = vmatpush1.msra.mxu0 0.0
        %402 = vmatprep.subr.mxu0 0.0
        %403 = vmatpush1.msra.mxu0 0.0
        %404 = vmatprep.subr.mxu0 0.0
        %405 = vmatpush1.msra.mxu0 0.0
        %406 = vmatprep.subr.mxu0 0.0
        %407 = vmatpush1.msra.mxu0 0.0
        %408 = vmatprep.subr.mxu0 0.0
        %409 = vmatpush1.msra.mxu0 0.0
        %410 = vmatprep.subr.mxu0 0.0
        %411 = vmatpush1.msra.mxu0 0.0
        %412 = vmatprep.subr.mxu0 0.0
        %413 = vmatpush1.msra.mxu0 0.0
        %414 = vmatprep.subr.mxu0 0.0
        %415 = vmatpush1.msra.mxu0 0.0
        %416 = vmatprep.subr.mxu0 0.0
        %417 = vmatpush1.msra.mxu0 0.0
        %418 = vmatprep.subr.mxu0 0.0
        %419 = vmatpush1.msra.mxu0 %v386
        %420 = vmatprep.subr.mxu0 0.0
        %421 = vmatpush2.msra.mxu0 0.0
        %422 = vmatprep.subr.mxu0 0.0
        %423 = vmatpush2.msra.mxu0 0.0
        %424 = vmatprep.subr.mxu0 0.0
        %425 = vmatpush2.msra.mxu0 0.0
        %426 = vmatprep.subr.mxu0 0.0
        %427 = vmatpush2.msra.mxu0 0.0
        %428 = vmatprep.subr.mxu0 0.0
        %429 = vmatpush2.msra.mxu0 0.0
        %430 = vmatprep.subr.mxu0 0.0
        %431 = vmatpush2.msra.mxu0 0.0
        %432 = vmatprep.subr.mxu0 0.0
        %433 = vmatpush2.msra.mxu0 0.0
        %434 = vmatprep.subr.mxu0 0.0
        %435 = vmatpush2.msra.mxu0 0.0
        %436 = vmatprep.subr.mxu0 0.0
        %437 = vmatpush2.msra.mxu0 0.0
        %438 = vmatprep.subr.mxu0 0.0
        %439 = vmatpush2.msra.mxu0 0.0
        %440 = vmatprep.subr.mxu0 0.0
        %441 = vmatpush2.msra.mxu0 0.0
        %442 = vmatprep.subr.mxu0 0.0
        %443 = vmatpush2.msra.mxu0 0.0
        %444 = vmatprep.subr.mxu0 0.0
        %445 = vmatpush2.msra.mxu0 0.0
        %446 = vmatprep.subr.mxu0 0.0
        %447 = vmatpush2.msra.mxu0 0.0
        %448 = vmatprep.subr.mxu0 0.0
        %449 = vmatpush2.msra.mxu0 0.0
        %450 = vmatprep.subr.mxu0 0.0
        %451 = vmatpush2.msra.mxu0 0.0
        %452 = vmatprep.mubr.f32.mxu0 0.0
        %453 = vmatmul.mubr.f32.gmra.mxu0 %v382
        %v454 = vpop.f32.mrf.mxu0
        %v455 = vadd.f32 %v379, %v454
        %v456 = vpop.f32.mrf.mxu0
        %457 = vdwg.mxu0
        %v458 = vxor.u32 %v455, 2147483648
        %v459 = vmul.f32 %v458, 1.442695
        %v460 = vpow.pop %v459
        %v461 = vadd.f32 %v460, 1.0
        %v462 = vrcp.pop %v461
        %v463 = vmul.f32 1.0, %v462
        %v464 = vlaneseq
        %v465 = vshrl.u32 %v464, 7
        %v466 = vsub.s32 0, %v465
        %v467 = vrot.slane %v463, %v466
        %469 = vbcast.lane.b32.xlu0 %v467, 256
        %v470 = vpop.permute.xlu0 %469
        %s472 = sor.u32 256, 8
        %473 = vbcast.lane.b32.xlu0 %v467, %s472
        %v474 = vpop.permute.xlu0 %473
        %s476 = sor.u32 256, 16
        %477 = vbcast.lane.b32.xlu0 %v467, %s476
        %v478 = vpop.permute.xlu0 %477
        %s480 = sor.u32 256, 24
        %481 = vbcast.lane.b32.xlu0 %v467, %s480
        %v482 = vpop.permute.xlu0 %481
        %v483 = vmul.f32 %v243, %v470
        %v484 = vmul.f32 %v244, %v470
        %v485 = vmul.f32 %v245, %v474
        %v486 = vmul.f32 %v246, %v474
        %v487 = vmul.f32 %v247, %v478
        %v488 = vmul.f32 %v248, %v478
        %v489 = vmul.f32 %v249, %v482
        %v490 = vmul.f32 %v250, %v482
        %491 = vst [vmem:[%s242] sm:$0xff] %v483
        %492 = vst [vmem:[%s242 + $0x8] sm:$0xff] %v484
        %493 = vst [vmem:[%s242 + $0x10] sm:$0xff] %v485
        %494 = vst [vmem:[%s242 + $0x18] sm:$0xff] %v486
        %495 = vst [vmem:[%s242 + $0x20] sm:$0xff] %v487
        %496 = vst [vmem:[%s242 + $0x28] sm:$0xff] %v488
        %497 = vst [vmem:[%s242 + $0x30] sm:$0xff] %v489
        %498 = vst [vmem:[%s242 + $0x38] sm:$0xff] %v490
        %s499 = sand.u32 %s140, 1
        %s500 = scalar_lea.sflag [#allocation4], %s499
        %s501 = sand.u32 %s140, 1
        %s502 = smul.addr %s501, 64
        %s503 = scalar_lea.vmem [#allocation5], %s502
        // Predicated region
        $region45: #{tpu_custom_call.1} parent=39 // pred_check
          %p504 = pneg %p150
        $region46: #{tpu_custom_call.1} parent=39 // pred_check_branch
          %506 = sbr.rel (%p504) target = $region48
        $region47: #{tpu_custom_call.1} parent=39 // pred_region
          %s508 = ssub.s32 1024, 1024
          %509 = vsyncadd %s500, %s508
          %s510 = smul.addr %s22, 8
          %s511 = smul.addr %s510, 128
          %s512 = scalar_lea.hbm %s5, %s511
          %s513 = sshll.u32 %s503, 4
          %s514 = int_to_ptr.vmem [resolvable:$true] %s513
          %519 = dma.vmem_to_hbm [thread:$0]  %s514, 1024, %s512, %s500, 256, 256, 16
        $region48: #{tpu_custom_call.1} parent=39 // pred_fallthru
          _
      $region40: #{tpu_custom_call.1} parent=5 // pred_fallthru
        _
      %p520 = scmp.le.s32.totalorder 2, %s17
      // Predicated region
      $region49: #{tpu_custom_call.1} parent=5 // pred_check
        %p521 = pneg %p520
      $region50: #{tpu_custom_call.1} parent=5 // pred_check_branch
        %523 = sbr.rel (%p521) target = $region52
      $region51: #{tpu_custom_call.1} parent=5 // pred_region
        %s524 = ssub.s32 %s17, 2
        // Predicated region
        $region53: #{tpu_custom_call.1} parent=51 // pred_check
          %p525 = pneg %p156
        $region54: #{tpu_custom_call.1} parent=51 // pred_check_branch
          %527 = sbr.rel (%p525) target = $region56
        $region55: #{tpu_custom_call.1} parent=51 // pred_region
          %s528 = sand.u32 %s141, 1
          %s529 = scalar_lea.sflag [#allocation4], %s528
          %s530 = sand.u32 %s141, 1
          %s531 = smul.addr %s530, 64
          %s532 = scalar_lea.vmem [#allocation5], %s531
          %533 = dma.done %s529, 1024
        $region56: #{tpu_custom_call.1} parent=51 // pred_fallthru
          _
      $region52: #{tpu_custom_call.1} parent=5 // pred_fallthru
        _
    $region6: #{tpu_custom_call.1} parent=1 // loop_footer
      %s21 = sadd.s32 1, %s17
    $region7: #{tpu_custom_call.1} parent=1 // loop_footer_branch
      %16 = sbr.rel target = $region3
    $region8: #{tpu_custom_call.1} parent=1 // loop_exit
      _
    %534 = vsyncpa [#allocation3], 1
    %s535 = scalar_lea.sflag [#allocation3], 1
    %536 = vsyncpa %s535, 1
    %537 = vsyncpa [#allocation4], 1
    %s538 = scalar_lea.sflag [#allocation4], 1
    %539 = vsyncpa %s538, 1

</llo_original>
